<compile_context>
chip_gen: v6e
topology: v6e:2x2x1
jax: 0.10.0
libtpu: 0.0.40
codegen_flags: <defaults>
</compile_context>

<pallas_src>
import math

import jax
import jax.numpy as jnp
import numpy as np
from jax.experimental import pallas as pl
from jax.experimental.pallas import tpu as pltpu


# ---------------------------------------------------------------------------
# Deterministic parameter construction (mirrors DCTLayer.__init__)
# ---------------------------------------------------------------------------
def get_freq_indices(channel):
    assert channel <= 15
    all_top_indices_x = [0, 0, 0, 1, 1, 3, 0, 2, 3, 2, 3, 3, 2, 2, 1]
    all_top_indices_y = [0, 1, 2, 0, 2, 0, 3, 2, 3, 1, 2, 1, 3, 0, 3]
    return all_top_indices_x[:channel], all_top_indices_y[:channel]


def _build_filter(pos, freq, POS):
    result = math.cos(math.pi * freq * (pos + 0.5) / POS) / math.sqrt(POS)
    if freq == 0:
        return result
    return result * math.sqrt(2)


def get_dct_filter(tile_size_x, tile_size_y, mapper_x, mapper_y, channel):
    dct_filter = np.zeros((channel, tile_size_x, tile_size_y), dtype=np.float32)
    c_part = channel // len(mapper_x)
    for i, (u_x, v_y) in enumerate(zip(mapper_x, mapper_y)):
        for t_x in range(tile_size_x):
            for t_y in range(tile_size_y):
                dct_filter[i * c_part:(i + 1) * c_part, t_x, t_y] = (
                    _build_filter(t_x, u_x, tile_size_x)
                    * _build_filter(t_y, v_y, tile_size_y)
                )
    return dct_filter


def make_spectral_weight(channel, height, width):
    mapper_x, mapper_y = get_freq_indices(channel)
    # NOTE: faithful to the PyTorch module — both mappers scale by height // 4.
    mapper_x = [mx * (height // 4) for mx in mapper_x]
    mapper_y = [my * (height // 4) for my in mapper_y]
    return jnp.asarray(get_dct_filter(height, width, mapper_x, mapper_y, channel))


# ---------------------------------------------------------------------------
# Pallas kernel: row-wise weighted reduction over the (padded) spatial axis
# ---------------------------------------------------------------------------
def dct_reduce_kernel(x_ref, w_ref, o_ref):
    # x_ref: (R_TILE, HW_pad) slab of flattened activations (streamed, pipelined)
    # w_ref: (R_TILE, HW_pad) replicated DCT filter rows (resident, fetched once)
    # o_ref: (1, 1, R_TILE)   lane-dense per-row results
    x = x_ref[...]
    w = w_ref[...]
    s = jnp.sum(x * w, axis=-1)                      # (R_TILE,) cross-lane reduce
    o_ref[...] = s.reshape(o_ref.shape).astype(o_ref.dtype)


# ---------------------------------------------------------------------------
# Wrapper
# ---------------------------------------------------------------------------
def _round_up(n, m):
    return ((n + m - 1) // m) * m


def _choose_row_tile(rows, channel, hw_pad, target_block_bytes):
    # The row tile must be a multiple of C (so the replicated filter lines up with
    # the channel of every row) and of 8 (sublane packing).
    base = (8 * channel) // math.gcd(8, channel)      # lcm(C, 8)
    rows_per_budget = max(1, target_block_bytes // (hw_pad * 4))
    r_tile = max(base, (rows_per_budget // base) * base)
    # Keep >= ~8 grid steps for big problems so the DMA pipeline has work to
    # overlap and v7x can split the grid across both TensorCores.
    r_tile = min(r_tile, max(base, _round_up((rows + 7) // 8, base)))
    # Never exceed the (base-rounded) total row count.
    return min(r_tile, _round_up(rows, base))


def dct_layer_forward(x, spectral_weight, *, target_block_bytes=2 * 1024 * 1024):
    """x: (B, C, H, W) f32 ; spectral_weight: (C, H, W) f32 -> (B, C) f32."""
    B, C, H, W = x.shape
    assert spectral_weight.shape == (C, H, W)
    HW = H * W
    hw_pad = _round_up(HW, 128)                       # lane-dense reduction axis

    rows = B * C
    r_tile = _choose_row_tile(rows, C, hw_pad, target_block_bytes)
    rows_pad = _round_up(rows, r_tile)
    num_tiles = rows_pad // r_tile

    # (B, C, H, W) -> (B*C, HW): a free reshape of the NCHW layout.
    x2 = x.reshape(rows, HW)
    w2 = spectral_weight.reshape(C, HW)
    if hw_pad != HW:                                  # zero-pad lane axis (math unchanged)
        x2 = jnp.pad(x2, ((0, 0), (0, hw_pad - HW)))
        w2 = jnp.pad(w2, ((0, 0), (0, hw_pad - HW)))
    if rows_pad != rows:                              # pad rows to a whole tile
        x2 = jnp.pad(x2, ((0, rows_pad - rows), (0, 0)))

    # Filter replicated so block row r corresponds to channel r % C. Small
    # (r_tile * hw_pad * 4 bytes) and resident in VMEM via constant index_map.
    w_tiled = jnp.tile(w2, (r_tile // C, 1))          # (r_tile, hw_pad)

    block_bytes = r_tile * hw_pad * 4
    # Double-buffered x stream + resident filter + headroom; clamp to a range
    # that is safe on v7x (64 MiB physical VMEM) as well as v5e/v6e.
    vmem_limit = int(min(max(4 * block_bytes + (1 << 20), 8 * 1024 * 1024),
                         64 * 1024 * 1024))

    out2 = pl.pallas_call(
        dct_reduce_kernel,
        out_shape=jax.ShapeDtypeStruct((num_tiles, 1, r_tile), x.dtype),
        grid=(num_tiles,),
        in_specs=[
            pl.BlockSpec((r_tile, hw_pad), lambda i: (i, 0)),    # streamed x slab
            pl.BlockSpec((r_tile, hw_pad), lambda i: (0, 0)),    # resident filter
        ],
        out_specs=pl.BlockSpec((1, 1, r_tile), lambda i: (i, 0, 0)),
        compiler_params=pltpu.CompilerParams(
            dimension_semantics=("parallel",),
            vmem_limit_bytes=vmem_limit,
        ),
        cost_estimate=pl.CostEstimate(
            flops=2 * B * C * HW,
            transcendentals=0,
            bytes_accessed=4 * (B * C * HW + C * HW + B * C),
        ),
    )(x2, w_tiled)

    return out2.reshape(rows_pad)[:rows].reshape(B, C)


# ---------------------------------------------------------------------------
if __name__ == "__main__":
    B, C, H, W = 2, 4, 16, 16

    key = jax.random.PRNGKey(0)
    x = jax.random.normal(key, (B, C, H, W), dtype=jnp.float32)

    spectral_weight = make_spectral_weight(C, H, W)   # (C, H, W)

    out = dct_layer_forward(x, spectral_weight)
    out = jax.block_until_ready(out)

    # Reference (plain JAX) check of the PyTorch semantics.
    ref = jnp.sum(x * spectral_weight[None, :, :, :], axis=(2, 3))
    assert out.shape == (B, C)
    assert jnp.allclose(out, ref, atol=1e-5, rtol=1e-5), (out, ref)

    print("KERNEL_OK")
</pallas_src>

<mosaic_0001>
module attributes {stable_mosaic.version = 11 : i64} {
  func.func @dct_reduce_kernel(%arg0: i32, %arg1: memref<8x256xf32, #tpu.memory_space<vmem>>, %arg2: memref<8x256xf32, #tpu.memory_space<vmem>>, %arg3: memref<1x1x8xf32, #tpu.memory_space<vmem>>) attributes {dimension_semantics = [#tpu.dimension_semantics<parallel>], iteration_bounds = array<i64: 1>, scalar_prefetch = 0 : i64, scratch_operands = 0 : i64, tpu.core_type = #tpu.core_type<tc>, window_params = [{transform_indices = @transform_0, window_bounds = array<i64: 8, 256>}, {pipeline_mode = #tpu.pipeline_mode<synchronous>, transform_indices = @transform_1, window_bounds = array<i64: 8, 256>}, {transform_indices = @transform_2, window_bounds = array<i64: 1, 1, 8>}]} {
    %c0 = arith.constant 0 : index
    %c0_0 = arith.constant 0 : index
    %0 = vector.load %arg1[%c0, %c0_0] : memref<8x256xf32, #tpu.memory_space<vmem>>, vector<8x256xf32>
    %c0_1 = arith.constant 0 : index
    %c0_2 = arith.constant 0 : index
    %1 = vector.load %arg2[%c0_1, %c0_2] : memref<8x256xf32, #tpu.memory_space<vmem>>, vector<8x256xf32>
    %2 = arith.mulf %0, %1 : vector<8x256xf32>
    %cst = arith.constant dense<0.000000e+00> : vector<8xf32>
    %3 = vector.multi_reduction <add>, %2, %cst [1] : vector<8x256xf32> to vector<8xf32>
    %4 = vector.shape_cast %3 : vector<8xf32> to vector<1x1x8xf32>
    %c0_3 = arith.constant 0 : index
    %c0_4 = arith.constant 0 : index
    %c0_5 = arith.constant 0 : index
    %5 = vector.load %arg3[%c0_3, %c0_4, %c0_5] : memref<1x1x8xf32, #tpu.memory_space<vmem>>, vector<1x1x8xf32>
    tpu.vector_store %arg3[%c0_3, %c0_4, %c0_5], %4 {strides = array<i32>} : memref<1x1x8xf32, #tpu.memory_space<vmem>>, vector<1x1x8xf32>,
    return
  }
  func.func @transform_0(%arg0: i32) -> (i32, i32) {
    %c0_i32 = arith.constant 0 : i32
    %c0_i32_0 = arith.constant 0 : i32
    return %arg0, %c0_i32 : i32, i32
  }
  func.func @transform_1(%arg0: i32) -> (i32, i32) {
    %c0_i32 = arith.constant 0 : i32
    %c0_i32_0 = arith.constant 0 : i32
    %c0_i32_1 = arith.constant 0 : i32
    return %c0_i32, %c0_i32_0 : i32, i32
  }
  func.func @transform_2(%arg0: i32) -> (i32, i32, i32) {
    %c0_i32 = arith.constant 0 : i32
    %c0_i32_0 = arith.constant 0 : i32
    %c0_i32_1 = arith.constant 0 : i32
    return %arg0, %c0_i32, %c0_i32_0 : i32, i32, i32
  }
}

</mosaic_0001>

<llo_original>
// kernel: tpu_custom_call.1
$region0: #{tpu_custom_call.1}
  #allocation0 [shape = 'u32[]', space=smem, size = 0x4, offset = 0x4, fixed_abs, tag = 'smem constant byte address 0x4 - core index']
  #allocation1 [shape = 'u32[144,128]{1,0:T(1,128)}', space=vmem, size = 0x12000, scoped, tag = 'internal scratch']
  %s0 = inlined_call_operand.hbm [shape: f32[8,256], index: 0, kind: input, shape index: {}]
  %s1 = inlined_call_operand.hbm [shape: f32[8,256], index: 1, kind: input, shape index: {}]
  %s2 = inlined_call_operand.hbm [shape: f32[1,1,8], index: 2, kind: output, shape index: {}]
  %s3 = sld [smem:[#allocation0]]
  $region26: #{tpu_custom_call.1} parent=0
    _
  %s5 = ssub.s32 1, %s3
  %s6 = scalar_select 0, %s5, %s3
  $region1: #{tpu_custom_call.1} parent=0
    #allocation2 [shape = 'u8[8192]{0}', space=vmem, size = 0x2000, scoped, tag = 'input window, operand 0, single buffered']
    #allocation3 [shape = 's32[1]{0}', space=sflag, size = 0x4, scoped, tag = 'scoped memory for tpu_custom_call.1']
    #allocation4 [shape = 's32[1]{0}', space=sflag, size = 0x4, scoped, tag = 'scoped memory for tpu_custom_call.1']
    #allocation5 [shape = 'u8[8192]{0}', space=vmem, size = 0x2000, scoped, tag = 'input window, operand 1, single buffered']
    #allocation6 [shape = 's32[1]{0}', space=sflag, size = 0x4, scoped, tag = 'scoped memory for tpu_custom_call.1']
    #allocation7 [shape = 'u8[512]{0}', space=vmem, size = 0x400, scoped, tag = 'output window, operand 0, single buffered']
    %7 = vsyncpa [#allocation3], 0
    %8 = vsyncpa [#allocation6], 0
    %9 = vsyncpa [#allocation4], 0
    // Predicated region
    $region2: #{tpu_custom_call.1} parent=1 // pred_check
      _
    $region3: #{tpu_custom_call.1} parent=1 // pred_check_branch
      %11 = sbr.rel (0) target = $region5
    $region4: #{tpu_custom_call.1} parent=1 // pred_region
      %s13 = ssub.s32 256, 256
      %14 = vsyncadd [#allocation3], %s13
      %s16 = sshll.u32 [#allocation2], 4
      %s17 = int_to_ptr.vmem [resolvable:$true] %s16
      %19 = dma.hbm_to_vmem [thread:$0]  %s0, 256, %s17, [#allocation3]
    $region5: #{tpu_custom_call.1} parent=1 // pred_fallthru
      _
    // Predicated region
    $region6: #{tpu_custom_call.1} parent=1 // pred_check
      _
    $region7: #{tpu_custom_call.1} parent=1 // pred_check_branch
      %21 = sbr.rel (0) target = $region9
    $region8: #{tpu_custom_call.1} parent=1 // pred_region
      %s23 = ssub.s32 256, 256
      %24 = vsyncadd [#allocation6], %s23
      %s26 = sshll.u32 [#allocation5], 4
      %s27 = int_to_ptr.vmem [resolvable:$true] %s26
      %29 = dma.hbm_to_vmem [thread:$0]  %s1, 256, %s27, [#allocation6]
    $region9: #{tpu_custom_call.1} parent=1 // pred_fallthru
      _
    // Predicated region
    $region10: #{tpu_custom_call.1} parent=1 // pred_check
      _
    $region11: #{tpu_custom_call.1} parent=1 // pred_check_branch
      %31 = sbr.rel (0) target = $region13
    $region12: #{tpu_custom_call.1} parent=1 // pred_region
      %32 = dma.done [#allocation3], 256
    $region13: #{tpu_custom_call.1} parent=1 // pred_fallthru
      _
    // Predicated region
    $region14: #{tpu_custom_call.1} parent=1 // pred_check
      _
    $region15: #{tpu_custom_call.1} parent=1 // pred_check_branch
      %34 = sbr.rel (0) target = $region17
    $region16: #{tpu_custom_call.1} parent=1 // pred_region
      %35 = dma.done [#allocation6], 256
    $region17: #{tpu_custom_call.1} parent=1 // pred_fallthru
      _
    %v36 = vld [vmem:[#allocation2] sm:$0xff]
    %v37 = vld [vmem:[#allocation2 + $0x8] sm:$0xff]
    %v38 = vld [vmem:[#allocation5] sm:$0xff]
    %v39 = vld [vmem:[#allocation5 + $0x8] sm:$0xff]
    %v40 = vmul.f32 %v36, %v38
    %v41 = vmul.f32 %v37, %v39
    %v42 = vadd.f32 %v40, %v41
    %43 = vadd.xlane.f32.xlu0 %v42
    %v44 = vpop.xlane.xlu0 %43
    %v46 = vlaneseq
    %v47 = vand.u32 %v46, 127
    %v48 = vlaneseq
    %v49 = vshrl.u32 %v48, 7
    %v50 = vsub.s32 %v47, %v49
    %v51 = vrot.slane %v44, %v50
    %vm53 = vcmask 57344
    %54 = vst.msk [vmem:[#allocation7] sm:$0x1] %vm53, %v51
    // Predicated region
    $region18: #{tpu_custom_call.1} parent=1 // pred_check
      _
    $region19: #{tpu_custom_call.1} parent=1 // pred_check_branch
      %56 = sbr.rel (0) target = $region21
    $region20: #{tpu_custom_call.1} parent=1 // pred_region
      %s58 = ssub.s32 16, 16
      %59 = vsyncadd [#allocation4], %s58
      %s61 = sshll.u32 [#allocation7], 4
      %s62 = int_to_ptr.vmem [resolvable:$true] %s61
      %64 = dma.vmem_to_hbm [thread:$0]  %s62, 16, %s2, [#allocation4]
    $region21: #{tpu_custom_call.1} parent=1 // pred_fallthru
      _
    // Predicated region
    $region22: #{tpu_custom_call.1} parent=1 // pred_check
      _
    $region23: #{tpu_custom_call.1} parent=1 // pred_check_branch
      %66 = sbr.rel (0) target = $region25
    $region24: #{tpu_custom_call.1} parent=1 // pred_region
      %67 = dma.done [#allocation4], 16
    $region25: #{tpu_custom_call.1} parent=1 // pred_fallthru
      _
    %68 = vsyncpa [#allocation3], 1
    %69 = vsyncpa [#allocation6], 1
    %70 = vsyncpa [#allocation4], 1

</llo_original>
